<compile_context>
chip_gen: v5e
topology: v5e:2x2
jax: 0.10.0
libtpu: 0.0.40
codegen_flags: <defaults>
</compile_context>

<pallas_src>
import functools

import jax
import jax.numpy as jnp
from jax.experimental import pallas as pl
from jax.experimental.pallas import tpu as pltpu

EPS = 1e-5  # nn.LayerNorm default
_MB = 1024 * 1024


def _round_up(x, m):
    return ((x + m - 1) // m) * m


def _prenorm_kernel(x_ref, w_ref, b_ref, o_ref, n_ref, *, inv_d, d, d_pad):
    # x_ref: (tm, Dp)  w_ref: (Dp, th)  b_ref: (1, th) f32  n_ref: (tm, Dp) scratch
    j = pl.program_id(1)

    # LayerNorm once per row tile (j == 0); result lives in VMEM scratch and is
    # reused for every H block of this row sweep.
    @pl.when(j == 0)
    def _():
        x = x_ref[...].astype(jnp.float32)
        mean = jnp.sum(x, axis=-1, keepdims=True) * inv_d     # pads are zero
        diff = x - mean
        if d != d_pad:  # static: zero the padded feature lanes for the var sum
            lane = jax.lax.broadcasted_iota(jnp.int32, diff.shape, 1)
            diff = jnp.where(lane < d, diff, 0.0)
        var = jnp.sum(diff * diff, axis=-1, keepdims=True) * inv_d  # biased (torch)
        n_ref[...] = (diff * jax.lax.rsqrt(var + EPS)).astype(n_ref.dtype)

    # LN affine is folded into W/b in the wrapper; only the projection remains.
    y = jnp.dot(n_ref[...], w_ref[...], preferred_element_type=jnp.float32)
    o_ref[...] = (y + b_ref[...]).astype(o_ref.dtype)


def _vmem_budget():
    """Per-generation scoped-VMEM budget (bytes)."""
    try:
        cap = int(pltpu.get_tpu_info().vmem_capacity_bytes)
    except Exception:
        cap = 0
    if cap >= 96 * _MB:        # v5e / v6e: 128 MiB physical -> use most of it
        return 96 * _MB
    if cap > 0:                # v7x: 64 MiB physical -> leave pipeline headroom
        return min(44 * _MB, max(cap - 16 * _MB, 16 * _MB))
    return 40 * _MB            # unknown -> conservative, safe on every gen


def prenorm(x, gamma, beta, w, b, *, tile_m=512, mxu_dtype=None):
    """PreNorm(dim, Linear(dim, hidden)) forward.

    x: (B, N, D); gamma, beta: (D,); w: (D, H); b: (H,)  ->  (B, N, H)
    mxu_dtype: optional MXU operand dtype (e.g. jnp.bfloat16 to halve W traffic
    and run the MXU at full rate); default keeps w.dtype.
    """
    B, N, D = x.shape
    H = w.shape[1]
    out_dtype = x.dtype
    mxu_dtype = w.dtype if mxu_dtype is None else mxu_dtype

    # ---- Fold LayerNorm affine into the projection (one-time, wrapper side) ----
    #   W' = gamma[:, None] * W,  b' = beta @ W + b   (kernel only normalizes)
    w32 = w.astype(jnp.float32)
    w_eff = (gamma.astype(jnp.float32)[:, None] * w32).astype(mxu_dtype)
    b_eff = beta.astype(jnp.float32) @ w32 + b.astype(jnp.float32)

    # ---- Tile geometry (8 / 128 aligned, lane-dense output) ----
    M = B * N
    Dp = max(128, _round_up(D, 128))
    Hp = max(128, _round_up(H, 128))

    tm = max(8, min(_round_up(tile_m, 8), _round_up(M, 8)))
    while tm > 128 and (_round_up(M, tm) - M) * 4 > M:   # avoid gross row padding
        tm = max(128, _round_up(tm // 2, 8))
    if M > 8 and _round_up(M, tm) <= tm:                  # >=2 row steps (v7x megacore)
        tm = _round_up((M + 1) // 2, 8)
    Mp = _round_up(M, tm)

    vmem_limit = _vmem_budget()
    x_item = jnp.dtype(x.dtype).itemsize
    w_item = jnp.dtype(mxu_dtype).itemsize
    o_item = jnp.dtype(out_dtype).itemsize

    def _fits(th_, w_bufs):
        foot = (2 * tm * Dp * x_item          # x stream (double-buffered)
                + tm * Dp * w_item            # normed(x) scratch
                + w_bufs * Dp * th_ * w_item  # weight block(s)
                + w_bufs * th_ * 4            # bias
                + 2 * tm * th_ * o_item)      # out (double-buffered)
        return foot <= (3 * vmem_limit) // 4

    if _fits(Hp, 1):
        th = Hp                               # whole (padded) W resident, 1 buffer
    else:
        th = 128
        for t in (4096, 2048, 1024, 512, 256):  # prefer 256-multiples (v6e/v7x MXU)
            if Hp % t == 0 and t < Hp and _fits(t, 2):
                th = t
                break
    n_h = Hp // th
    # TODO(synk): when n_h > 1 and th > tm, keeping W resident instead of x can
    # be lower HBM traffic; current layout follows the x-resident/LN-once plan.

    # ---- Pad only when actually needed (each pad is a full HBM pass) ----
    x2 = x.reshape(M, D)
    x_p = x2 if (Mp == M and Dp == D) else jnp.pad(x2, ((0, Mp - M), (0, Dp - D)))
    w_p = w_eff if (Dp == D and Hp == H) else jnp.pad(w_eff, ((0, Dp - D), (0, Hp - H)))
    b_p = (b_eff if Hp == H else jnp.pad(b_eff, (0, Hp - H)))
    b_p = b_p.reshape(1, Hp).astype(jnp.float32)

    grid = (Mp // tm, n_h)   # rows outer ("parallel"), H inner ("arbitrary")
    kernel = functools.partial(_prenorm_kernel, inv_d=1.0 / D, d=D, d_pad=Dp)

    def _call(single_buffer_resident):
        extra = {}
        if single_buffer_resident:
            # W / bias block index is constant over the whole grid: one buffer.
            extra = dict(pipeline_mode=pl.Buffered(1))
        return pl.pallas_call(
            kernel,
            out_shape=jax.ShapeDtypeStruct((Mp, Hp), out_dtype),
            grid_spec=pltpu.PrefetchScalarGridSpec(
                num_scalar_prefetch=0,
                grid=grid,
                in_specs=[
                    pl.BlockSpec((tm, Dp), lambda i, j: (i, 0)),           # x (resident over j)
                    pl.BlockSpec((Dp, th), lambda i, j: (0, j), **extra),  # W
                    pl.BlockSpec((1, th), lambda i, j: (0, j), **extra),   # bias
                ],
                out_specs=pl.BlockSpec((tm, th), lambda i, j: (i, j)),
                scratch_shapes=[pltpu.VMEM((tm, Dp), mxu_dtype)],          # normed(x)
            ),
            compiler_params=pltpu.CompilerParams(
                dimension_semantics=("parallel", "arbitrary"),
                vmem_limit_bytes=vmem_limit,
            ),
        )(x_p, w_p, b_p)

    if n_h == 1:
        try:
            out_p = _call(True)
        except Exception:
            # pipeline_mode / pl.Buffered not supported here -> default buffering.
            out_p = _call(False)
    else:
        out_p = _call(False)

    if Mp != M or Hp != H:
        out_p = out_p[:M, :H]
    return out_p.reshape(B, N, H)


def prenorm_ref(x, gamma, beta, w, b):
    """Pure-JAX reference matching torch semantics."""
    mean = jnp.mean(x, axis=-1, keepdims=True)
    var = jnp.mean((x - mean) ** 2, axis=-1, keepdims=True)
    normed = (x - mean) / jnp.sqrt(var + EPS)
    normed = normed * gamma + beta
    return normed @ w + b


if __name__ == "__main__":
    key = jax.random.PRNGKey(0)

    # --- Test 1: small shapes matching the module spec ---
    B, N, D, H = 2, 8, 32, 32
    kx, kw, kb, kg, kbt = jax.random.split(key, 5)
    x = jax.random.normal(kx, (B, N, D), dtype=jnp.float32)
    gamma = 1.0 + 0.05 * jax.random.normal(kg, (D,), dtype=jnp.float32)
    beta = 0.05 * jax.random.normal(kbt, (D,), dtype=jnp.float32)
    w = jax.random.normal(kw, (D, H), dtype=jnp.float32) * (1.0 / jnp.sqrt(D))
    b = jax.random.normal(kb, (H,), dtype=jnp.float32) * 0.01

    out = jax.block_until_ready(prenorm(x, gamma, beta, w, b))
    ref = prenorm_ref(x, gamma, beta, w, b)
    assert out.shape == (B, N, H)
    assert jnp.allclose(out, ref, atol=1e-4, rtol=1e-4)

    # --- Test 2: multi-tile grid + ragged D/H padding path + affine fold ---
    B2, N2, D2, H2 = 2, 136, 96, 160
    k1, k2, k3, k4, k5 = jax.random.split(jax.random.PRNGKey(1), 5)
    x2 = jax.random.normal(k1, (B2, N2, D2), dtype=jnp.float32)
    gamma2 = 1.0 + 0.1 * jax.random.normal(k2, (D2,), dtype=jnp.float32)
    beta2 = 0.1 * jax.random.normal(k3, (D2,), dtype=jnp.float32)
    w2 = jax.random.normal(k4, (D2, H2), dtype=jnp.float32) * (1.0 / jnp.sqrt(D2))
    b2 = jax.random.normal(k5, (H2,), dtype=jnp.float32) * 0.01

    out2 = jax.block_until_ready(prenorm(x2, gamma2, beta2, w2, b2))
    ref2 = prenorm_ref(x2, gamma2, beta2, w2, b2)
    assert out2.shape == (B2, N2, H2)
    assert jnp.allclose(out2, ref2, atol=1e-3, rtol=1e-3)

    # TODO(synk): `fn` in PreNorm is an arbitrary sub-module; here it is fused
    # as a Linear(dim, hidden).  Swap the matmul stage to fuse a different fn
    # (e.g. attention / FFN) as needed.
    print("KERNEL_OK")
</pallas_src>

<mosaic_0001>
module attributes {stable_mosaic.version = 11 : i64} {
  func.func @_prenorm_kernel(%arg0: i32, %arg1: i32, %arg2: memref<8x128xf32, #tpu.memory_space<vmem>>, %arg3: memref<128x128xf32, #tpu.memory_space<vmem>>, %arg4: memref<1x128xf32, #tpu.memory_space<vmem>>, %arg5: memref<8x128xf32, #tpu.memory_space<vmem>>, %arg6: memref<8x128xf32, #tpu.memory_space<vmem>>) attributes {dimension_semantics = [#tpu.dimension_semantics<parallel>, #tpu.dimension_semantics<arbitrary>], iteration_bounds = array<i64: 2, 1>, scalar_prefetch = 0 : i64, scratch_operands = 1 : i64, tpu.core_type = #tpu.core_type<tc>, window_params = [{transform_indices = @transform_0, window_bounds = array<i64: 8, 128>}, {pipeline_mode = #tpu.pipeline_mode<synchronous>, transform_indices = @transform_1, window_bounds = array<i64: 128, 128>}, {pipeline_mode = #tpu.pipeline_mode<synchronous>, transform_indices = @transform_2, window_bounds = array<i64: 1, 128>}, {transform_indices = @transform_3, window_bounds = array<i64: 8, 128>}]} {
    %c0_i32 = arith.constant 0 : i32
    %0 = arith.cmpi eq, %arg1, %c0_i32 : i32
    %1 = arith.extui %0 : i1 to i32
    %c0_i32_0 = arith.constant 0 : i32
    %2 = arith.cmpi ne, %1, %c0_i32_0 : i32
    scf.if %2 {
      %c0_8 = arith.constant 0 : index
      %c0_9 = arith.constant 0 : index
      %10 = vector.load %arg2[%c0_8, %c0_9] : memref<8x128xf32, #tpu.memory_space<vmem>>, vector<8x128xf32>
      %cst_10 = arith.constant dense<0.000000e+00> : vector<8xf32>
      %11 = vector.multi_reduction <add>, %10, %cst_10 [1] : vector<8x128xf32> to vector<8xf32>
      %12 = vector.shape_cast %11 : vector<8xf32> to vector<8x1xf32>
      %cst_11 = arith.constant 3.125000e-02 : f32
      %13 = vector.broadcast %cst_11 : f32 to vector<8x1xf32>
      %14 = arith.mulf %12, %13 : vector<8x1xf32>
      %15 = vector.broadcast %14 : vector<8x1xf32> to vector<8x128xf32>
      %16 = arith.subf %10, %15 : vector<8x128xf32>
      %17 = tpu.iota {dimensions = array<i32: 1>} : vector<8x128xi32>
      %c32_i32 = arith.constant 32 : i32
      %18 = vector.broadcast %c32_i32 : i32 to vector<8x128xi32>
      %19 = arith.cmpi slt, %17, %18 : vector<8x128xi32>
      %cst_12 = arith.constant 0.000000e+00 : f32
      %20 = vector.broadcast %cst_12 : f32 to vector<8x128xf32>
      %21 = arith.select %19, %16, %20 : vector<8x128xi1>, vector<8x128xf32>
      %22 = arith.mulf %21, %21 : vector<8x128xf32>
      %cst_13 = arith.constant dense<0.000000e+00> : vector<8xf32>
      %23 = vector.multi_reduction <add>, %22, %cst_13 [1] : vector<8x128xf32> to vector<8xf32>
      %24 = vector.shape_cast %23 : vector<8xf32> to vector<8x1xf32>
      %cst_14 = arith.constant 3.125000e-02 : f32
      %25 = vector.broadcast %cst_14 : f32 to vector<8x1xf32>
      %26 = arith.mulf %24, %25 : vector<8x1xf32>
      %cst_15 = arith.constant 9.99999974E-6 : f32
      %27 = vector.broadcast %cst_15 : f32 to vector<8x1xf32>
      %28 = arith.addf %26, %27 : vector<8x1xf32>
      %29 = math.rsqrt %28 : vector<8x1xf32>
      %30 = vector.broadcast %29 : vector<8x1xf32> to vector<8x128xf32>
      %31 = arith.mulf %21, %30 : vector<8x128xf32>
      %c0_16 = arith.constant 0 : index
      %c0_17 = arith.constant 0 : index
      %32 = vector.load %arg6[%c0_16, %c0_17] : memref<8x128xf32, #tpu.memory_space<vmem>>, vector<8x128xf32>
      tpu.vector_store %arg6[%c0_16, %c0_17], %31 {strides = array<i32>} : memref<8x128xf32, #tpu.memory_space<vmem>>, vector<8x128xf32>,
    } else {
    }
    %c0 = arith.constant 0 : index
    %c0_1 = arith.constant 0 : index
    %3 = vector.load %arg6[%c0, %c0_1] : memref<8x128xf32, #tpu.memory_space<vmem>>, vector<8x128xf32>
    %c0_2 = arith.constant 0 : index
    %c0_3 = arith.constant 0 : index
    %4 = vector.load %arg3[%c0_2, %c0_3] : memref<128x128xf32, #tpu.memory_space<vmem>>, vector<128x128xf32>
    %cst = arith.constant dense<0.000000e+00> : vector<8x128xf32>
    %5 = tpu.matmul %3, %4, %cst {dimension_numbers = #tpu.dot_dimension_numbers<[1], [0], [0], [1], [0, 0, 1, 1], [], []>} : vector<8x128xf32>, vector<128x128xf32>, vector<8x128xf32> -> vector<8x128xf32>
    %c0_4 = arith.constant 0 : index
    %c0_5 = arith.constant 0 : index
    %6 = vector.load %arg4[%c0_4, %c0_5] : memref<1x128xf32, #tpu.memory_space<vmem>>, vector<1x128xf32>
    %7 = vector.broadcast %6 : vector<1x128xf32> to vector<8x128xf32>
    %8 = arith.addf %5, %7 : vector<8x128xf32>
    %c0_6 = arith.constant 0 : index
    %c0_7 = arith.constant 0 : index
    %9 = vector.load %arg5[%c0_6, %c0_7] : memref<8x128xf32, #tpu.memory_space<vmem>>, vector<8x128xf32>
    tpu.vector_store %arg5[%c0_6, %c0_7], %8 {strides = array<i32>} : memref<8x128xf32, #tpu.memory_space<vmem>>, vector<8x128xf32>,
    return
  }
  func.func @transform_0(%arg0: i32, %arg1: i32) -> (i32, i32) {
    %c0_i32 = arith.constant 0 : i32
    %c0_i32_0 = arith.constant 0 : i32
    return %arg0, %c0_i32 : i32, i32
  }
  func.func @transform_1(%arg0: i32, %arg1: i32) -> (i32, i32) {
    %c0_i32 = arith.constant 0 : i32
    %c0_i32_0 = arith.constant 0 : i32
    return %c0_i32, %arg1 : i32, i32
  }
  func.func @transform_2(%arg0: i32, %arg1: i32) -> (i32, i32) {
    %c0_i32 = arith.constant 0 : i32
    %c0_i32_0 = arith.constant 0 : i32
    return %c0_i32, %arg1 : i32, i32
  }
  func.func @transform_3(%arg0: i32, %arg1: i32) -> (i32, i32) {
    %c0_i32 = arith.constant 0 : i32
    return %arg0, %arg1 : i32, i32
  }
}

module attributes {stable_mosaic.version = 11 : i64} {
  func.func @_prenorm_kernel(%arg0: i32, %arg1: i32, %arg2: memref<8x128xf32, #tpu.memory_space<vmem>>, %arg3: memref<128x128xf32, #tpu.memory_space<vmem>>, %arg4: memref<1x128xf32, #tpu.memory_space<vmem>>, %arg5: memref<8x128xf32, #tpu.memory_space<vmem>>, %arg6: memref<8x128xf32, #tpu.memory_space<vmem>>) attributes {dimension_semantics = [#tpu.dimension_semantics<parallel>, #tpu.dimension_semantics<arbitrary>], iteration_bounds = array<i64: 2, 1>, scalar_prefetch = 0 : i64, scratch_operands = 1 : i64, tpu.core_type = #tpu.core_type<tc>, window_params = [{transform_indices = @transform_0, window_bounds = array<i64: 8, 128>}, {transform_indices = @transform_1, window_bounds = array<i64: 128, 128>}, {transform_indices = @transform_2, window_bounds = array<i64: 1, 128>}, {transform_indices = @transform_3, window_bounds = array<i64: 8, 128>}]} {
    %c0_i32 = arith.constant 0 : i32
    %0 = arith.cmpi eq, %arg1, %c0_i32 : i32
    %1 = arith.extui %0 : i1 to i32
    %c0_i32_0 = arith.constant 0 : i32
    %2 = arith.cmpi ne, %1, %c0_i32_0 : i32
    scf.if %2 {
      %c0_8 = arith.constant 0 : index
      %c0_9 = arith.constant 0 : index
      %10 = vector.load %arg2[%c0_8, %c0_9] : memref<8x128xf32, #tpu.memory_space<vmem>>, vector<8x128xf32>
      %cst_10 = arith.constant dense<0.000000e+00> : vector<8xf32>
      %11 = vector.multi_reduction <add>, %10, %cst_10 [1] : vector<8x128xf32> to vector<8xf32>
      %12 = vector.shape_cast %11 : vector<8xf32> to vector<8x1xf32>
      %cst_11 = arith.constant 3.125000e-02 : f32
      %13 = vector.broadcast %cst_11 : f32 to vector<8x1xf32>
      %14 = arith.mulf %12, %13 : vector<8x1xf32>
      %15 = vector.broadcast %14 : vector<8x1xf32> to vector<8x128xf32>
      %16 = arith.subf %10, %15 : vector<8x128xf32>
      %17 = tpu.iota {dimensions = array<i32: 1>} : vector<8x128xi32>
      %c32_i32 = arith.constant 32 : i32
      %18 = vector.broadcast %c32_i32 : i32 to vector<8x128xi32>
      %19 = arith.cmpi slt, %17, %18 : vector<8x128xi32>
      %cst_12 = arith.constant 0.000000e+00 : f32
      %20 = vector.broadcast %cst_12 : f32 to vector<8x128xf32>
      %21 = arith.select %19, %16, %20 : vector<8x128xi1>, vector<8x128xf32>
      %22 = arith.mulf %21, %21 : vector<8x128xf32>
      %cst_13 = arith.constant dense<0.000000e+00> : vector<8xf32>
      %23 = vector.multi_reduction <add>, %22, %cst_13 [1] : vector<8x128xf32> to vector<8xf32>
      %24 = vector.shape_cast %23 : vector<8xf32> to vector<8x1xf32>
      %cst_14 = arith.constant 3.125000e-02 : f32
      %25 = vector.broadcast %cst_14 : f32 to vector<8x1xf32>
      %26 = arith.mulf %24, %25 : vector<8x1xf32>
      %cst_15 = arith.constant 9.99999974E-6 : f32
      %27 = vector.broadcast %cst_15 : f32 to vector<8x1xf32>
      %28 = arith.addf %26, %27 : vector<8x1xf32>
      %29 = math.rsqrt %28 : vector<8x1xf32>
      %30 = vector.broadcast %29 : vector<8x1xf32> to vector<8x128xf32>
      %31 = arith.mulf %21, %30 : vector<8x128xf32>
      %c0_16 = arith.constant 0 : index
      %c0_17 = arith.constant 0 : index
      %32 = vector.load %arg6[%c0_16, %c0_17] : memref<8x128xf32, #tpu.memory_space<vmem>>, vector<8x128xf32>
      tpu.vector_store %arg6[%c0_16, %c0_17], %31 {strides = array<i32>} : memref<8x128xf32, #tpu.memory_space<vmem>>, vector<8x128xf32>,
    } else {
    }
    %c0 = arith.constant 0 : index
    %c0_1 = arith.constant 0 : index
    %3 = vector.load %arg6[%c0, %c0_1] : memref<8x128xf32, #tpu.memory_space<vmem>>, vector<8x128xf32>
    %c0_2 = arith.constant 0 : index
    %c0_3 = arith.constant 0 : index
    %4 = vector.load %arg3[%c0_2, %c0_3] : memref<128x128xf32, #tpu.memory_space<vmem>>, vector<128x128xf32>
    %cst = arith.constant dense<0.000000e+00> : vector<8x128xf32>
    %5 = tpu.matmul %3, %4, %cst {dimension_numbers = #tpu.dot_dimension_numbers<[1], [0], [0], [1], [0, 0, 1, 1], [], []>} : vector<8x128xf32>, vector<128x128xf32>, vector<8x128xf32> -> vector<8x128xf32>
    %c0_4 = arith.constant 0 : index
    %c0_5 = arith.constant 0 : index
    %6 = vector.load %arg4[%c0_4, %c0_5] : memref<1x128xf32, #tpu.memory_space<vmem>>, vector<1x128xf32>
    %7 = vector.broadcast %6 : vector<1x128xf32> to vector<8x128xf32>
    %8 = arith.addf %5, %7 : vector<8x128xf32>
    %c0_6 = arith.constant 0 : index
    %c0_7 = arith.constant 0 : index
    %9 = vector.load %arg5[%c0_6, %c0_7] : memref<8x128xf32, #tpu.memory_space<vmem>>, vector<8x128xf32>
    tpu.vector_store %arg5[%c0_6, %c0_7], %8 {strides = array<i32>} : memref<8x128xf32, #tpu.memory_space<vmem>>, vector<8x128xf32>,
    return
  }
  func.func @transform_0(%arg0: i32, %arg1: i32) -> (i32, i32) {
    %c0_i32 = arith.constant 0 : i32
    %c0_i32_0 = arith.constant 0 : i32
    return %arg0, %c0_i32 : i32, i32
  }
  func.func @transform_1(%arg0: i32, %arg1: i32) -> (i32, i32) {
    %c0_i32 = arith.constant 0 : i32
    %c0_i32_0 = arith.constant 0 : i32
    return %c0_i32, %arg1 : i32, i32
  }
  func.func @transform_2(%arg0: i32, %arg1: i32) -> (i32, i32) {
    %c0_i32 = arith.constant 0 : i32
    %c0_i32_0 = arith.constant 0 : i32
    return %c0_i32, %arg1 : i32, i32
  }
  func.func @transform_3(%arg0: i32, %arg1: i32) -> (i32, i32) {
    %c0_i32 = arith.constant 0 : i32
    return %arg0, %arg1 : i32, i32
  }
}

</mosaic_0001>

<llo_original>
// kernel: tpu_custom_call.1
$region0: #{tpu_custom_call.1}
  #allocation0 [shape = 'u32[]', space=smem, size = 0x4, offset = 0x4, fixed_abs, tag = 'smem constant byte address 0x4 - core index']
  #allocation1 [shape = 'u32[72,128]{1,0:T(1,128)}', space=vmem, size = 0x9000, scoped, tag = 'internal scratch']
  #allocation2 [shape = 'f32[8,128]{1,0:T(8,128)}', space=vmem, size = 0x1000, scoped, tag = 'scratch operand']
  %s0 = inlined_call_operand.hbm [shape: f32[16,128], index: 0, kind: input, shape index: {}]
  %s1 = inlined_call_operand.hbm [shape: f32[128,128], index: 1, kind: input, shape index: {}]
  %s2 = inlined_call_operand.vmem [shape: f32[1,128], index: 2, kind: input, shape index: {}]
  %s3 = inlined_call_operand.hbm [shape: f32[16,128], index: 3, kind: output, shape index: {}]
  %s4 = sld [smem:[#allocation0]]
  $region57: #{tpu_custom_call.1} parent=0
    _
  %s6 = ssub.s32 1, %s4
  %s7 = scalar_select 0, %s6, %s4
  $region1: #{tpu_custom_call.1} parent=0
    #allocation3 [shape = 'u8[8192]{0}', space=vmem, size = 0x2000, scoped, tag = 'input window, operand 0']
    #allocation4 [shape = 's32[2]{0}', space=sflag, size = 0x8, scoped, tag = 'scoped memory for tpu_custom_call.1']
    #allocation5 [shape = 's32[2]{0}', space=sflag, size = 0x8, scoped, tag = 'scoped memory for tpu_custom_call.1']
    #allocation6 [shape = 'u8[65536]{0}', space=vmem, size = 0x10000, scoped, tag = 'input window, operand 1, single buffered']
    #allocation7 [shape = 's32[1]{0}', space=sflag, size = 0x4, scoped, tag = 'scoped memory for tpu_custom_call.1']
    #allocation8 [shape = 'u8[8192]{0}', space=vmem, size = 0x2000, scoped, tag = 'output window, operand 0']
    %8 = vsyncpa [#allocation4], 0
    %s9 = scalar_lea.sflag [#allocation4], 1
    %10 = vsyncpa %s9, 0
    %11 = vsyncpa [#allocation7], 0
    %12 = vsyncpa [#allocation5], 0
    %s13 = scalar_lea.sflag [#allocation5], 1
    %14 = vsyncpa %s13, 0
    loop: start=0, step=1, limit=4
    $region2: #{tpu_custom_call.1} parent=1 // loop_pre_header
      _
    $region3: #{tpu_custom_call.1} parent=1 // loop_header
      %s16 = sphi 0, %s20
      %p17 = scmp.ge.s32.totalorder %s16, 4
      %s23 = sphi 0, %s35
      %s24 = sphi 0, %s31
      %s25 = sphi 0, %s23
      %s26 = sphi 0, %s24
      %s27 = sphi 0, %s25
      %s28 = sphi 0, %s26
      %s38 = sphi 0, %s40
      %s41 = sphi 0, %s38
      %s42 = sphi 0, %s41
      %s58 = sphi 0, %s42
      %s64 = sphi 0, %s66
      %s67 = sphi 0, %s64
      %s68 = sphi 0, %s67
      %s84 = sphi 0, %s68
      %s90 = sphi 0, %s92
      %s93 = sphi 0, %s90
      %s94 = sphi 0, %s93
      %s110 = sphi 0, %s94
      %s118 = sphi 0, %s120
      %s121 = sphi 0, %s118
      %s122 = sphi 0, %s121
      %s138 = sphi 0, %s122
    $region4: #{tpu_custom_call.1} parent=1 // loop_header_branch
      %19 = sbr.rel (%p17) target = $region8
    $region5: #{tpu_custom_call.1} parent=1 // loop_body
      %s21 = ssub.s32 %s16, 1
      %s22 = ssub.s32 %s16, 2
      %s29 = sadd.s32 1, %s24
      %p30 = scmp.ge.s32.totalorder %s29, 1
      %s31 = scalar_select %p30, 0, %s29
      %s32 = sadd.s32 1, %s23
      %s33 = scalar_select %p30, %s32, %s23
      %p34 = scmp.ge.s32.totalorder %s33, 2
      %s35 = scalar_select %p34, 0, %s33
      %s36 = ssub.s32 %s23, %s35
      %p37 = scmp.eq.s32.totalorder %s36, 0
      %s39 = sadd.s32 %s38, 1
      %s40 = scalar_select %p37, %s38, %s39
      %p43 = pneg %p37
      %p44 = scmp.eq.s32.totalorder %s16, 1
      %p45 = por %p43, %p44
      %p46 = scmp.ne.s32.totalorder %s38, %s41
      %p47 = scmp.eq.s32.totalorder %s16, 0
      %p48 = por %p46, %p47
      %p49 = scmp.ne.s32.totalorder %s38, %s41
      %p50 = scmp.eq.s32.totalorder %s21, 1
      %p51 = por %p49, %p50
      %p52 = scmp.ne.s32.totalorder %s41, %s42
      %p53 = scmp.eq.s32.totalorder %s21, 0
      %p54 = por %p52, %p53
      %p55 = scmp.ne.s32.totalorder %s41, %s42
      %p56 = scmp.eq.s32.totalorder %s22, 1
      %p57 = por %p55, %p56
      %p59 = scmp.ne.s32.totalorder %s42, %s58
      %p60 = scmp.eq.s32.totalorder %s22, 0
      %p61 = por %p59, %p60
      %s62 = ssub.s32 %s24, %s31
      %p63 = scmp.eq.s32.totalorder %s62, 0
      %s65 = sadd.s32 %s64, 1
      %s66 = scalar_select %p63, %s64, %s65
      %p69 = pneg %p63
      %p70 = scmp.eq.s32.totalorder %s16, 1
      %p71 = por %p69, %p70
      %p72 = scmp.ne.s32.totalorder %s64, %s67
      %p73 = scmp.eq.s32.totalorder %s16, 0
      %p74 = por %p72, %p73
      %p75 = scmp.ne.s32.totalorder %s64, %s67
      %p76 = scmp.eq.s32.totalorder %s21, 1
      %p77 = por %p75, %p76
      %p78 = scmp.ne.s32.totalorder %s67, %s68
      %p79 = scmp.eq.s32.totalorder %s21, 0
      %p80 = por %p78, %p79
      %p81 = scmp.ne.s32.totalorder %s67, %s68
      %p82 = scmp.eq.s32.totalorder %s22, 1
      %p83 = por %p81, %p82
      %p85 = scmp.ne.s32.totalorder %s68, %s84
      %p86 = scmp.eq.s32.totalorder %s22, 0
      %p87 = por %p85, %p86
      %s88 = ssub.s32 %s24, %s31
      %p89 = scmp.eq.s32.totalorder %s88, 0
      %s91 = sadd.s32 %s90, 1
      %s92 = scalar_select %p89, %s90, %s91
      %p95 = pneg %p89
      %p96 = scmp.eq.s32.totalorder %s16, 1
      %p97 = por %p95, %p96
      %p98 = scmp.ne.s32.totalorder %s90, %s93
      %p99 = scmp.eq.s32.totalorder %s16, 0
      %p100 = por %p98, %p99
      %p101 = scmp.ne.s32.totalorder %s90, %s93
      %p102 = scmp.eq.s32.totalorder %s21, 1
      %p103 = por %p101, %p102
      %p104 = scmp.ne.s32.totalorder %s93, %s94
      %p105 = scmp.eq.s32.totalorder %s21, 0
      %p106 = por %p104, %p105
      %p107 = scmp.ne.s32.totalorder %s93, %s94
      %p108 = scmp.eq.s32.totalorder %s22, 1
      %p109 = por %p107, %p108
      %p111 = scmp.ne.s32.totalorder %s94, %s110
      %p112 = scmp.eq.s32.totalorder %s22, 0
      %p113 = por %p111, %p112
      %s114 = ssub.s32 %s23, %s35
      %s115 = ssub.s32 %s24, %s31
      %s116 = sor.u32 %s114, %s115
      %p117 = scmp.eq.s32.totalorder %s116, 0
      %s119 = sadd.s32 %s118, 1
      %s120 = scalar_select %p117, %s118, %s119
      %p123 = pneg %p117
      %p124 = scmp.eq.s32.totalorder %s16, 1
      %p125 = por %p123, %p124
      %p126 = scmp.ne.s32.totalorder %s118, %s121
      %p127 = scmp.eq.s32.totalorder %s16, 0
      %p128 = por %p126, %p127
      %p129 = scmp.ne.s32.totalorder %s118, %s121
      %p130 = scmp.eq.s32.totalorder %s21, 1
      %p131 = por %p129, %p130
      %p132 = scmp.ne.s32.totalorder %s121, %s122
      %p133 = scmp.eq.s32.totalorder %s21, 0
      %p134 = por %p132, %p133
      %p135 = scmp.ne.s32.totalorder %s121, %s122
      %p136 = scmp.eq.s32.totalorder %s22, 1
      %p137 = por %p135, %p136
      %p139 = scmp.ne.s32.totalorder %s122, %s138
      %p140 = scmp.eq.s32.totalorder %s22, 0
      %p141 = por %p139, %p140
      %p142 = scmp.le.s32.totalorder 1, %s16
      %p143 = scmp.lt.s32.totalorder %s16, 3
      %p144 = pnand %p142, %p143
      %p145 = pneg %p144
      // Predicated region
      $region9: #{tpu_custom_call.1} parent=5 // pred_check
        _
      $region10: #{tpu_custom_call.1} parent=5 // pred_check_branch
        %147 = sbr.rel (%p144) target = $region12
      $region11: #{tpu_custom_call.1} parent=5 // pred_region
        %s148 = ssub.s32 %s16, 1
        // Predicated region
        $region13: #{tpu_custom_call.1} parent=11 // pred_check
          %p149 = pneg %p80
        $region14: #{tpu_custom_call.1} parent=11 // pred_check_branch
          %151 = sbr.rel (%p149) target = $region16
        $region15: #{tpu_custom_call.1} parent=11 // pred_region
          %153 = vsyncadd [#allocation7], 0
          %s154 = smul.addr %s26, 8
          %s155 = scalar_lea.hbm %s1, %s154
          %s156 = sshll.u32 %s155, 4
          %s157 = int_to_ptr.hbm [resolvable:$true] %s156
          %s158 = sshll.u32 [#allocation6], 4
          %s159 = int_to_ptr.vmem [resolvable:$true] %s158
          %164 = dma.hbm_to_vmem [thread:$0]  %s157, 2048, %s159, [#allocation7], 128, 128, 8
        $region16: #{tpu_custom_call.1} parent=11 // pred_fallthru
          _
        // Predicated region
        $region17: #{tpu_custom_call.1} parent=11 // pred_check
          %p165 = pneg %p106
        $region18: #{tpu_custom_call.1} parent=11 // pred_check_branch
          %167 = sbr.rel (%p165) target = $region20
        $region19: #{tpu_custom_call.1} parent=11 // pred_region
          %p168 = scmp.lt.s32.totalorder %s26, 0
          %s169 = scalar_select %p168, %s26, 0
          %s170 = scalar_lea.vmem %s2, %s169
        $region20: #{tpu_custom_call.1} parent=11 // pred_fallthru
          _
      $region12: #{tpu_custom_call.1} parent=5 // pred_fallthru
        _
      %p171 = scmp.lt.s32.totalorder %s16, 2
      // Predicated region
      $region21: #{tpu_custom_call.1} parent=5 // pred_check
        %p172 = pneg %p171
      $region22: #{tpu_custom_call.1} parent=5 // pred_check_branch
        %174 = sbr.rel (%p172) target = $region24
      $region23: #{tpu_custom_call.1} parent=5 // pred_region
        // Predicated region
        $region25: #{tpu_custom_call.1} parent=23 // pred_check
          %p175 = pneg %p48
        $region26: #{tpu_custom_call.1} parent=23 // pred_check_branch
          %177 = sbr.rel (%p175) target = $region28
        $region27: #{tpu_custom_call.1} parent=23 // pred_region
          %s178 = sand.u32 %s38, 1
          %s179 = scalar_lea.sflag [#allocation4], %s178
          %s180 = sand.u32 %s38, 1
          %s181 = smul.addr %s180, 8
          %s182 = scalar_lea.vmem [#allocation3], %s181
          %184 = vsyncadd %s179, 0
          %s185 = smul.addr %s23, 8
          %s186 = scalar_lea.hbm %s0, %s185
          %s188 = sshll.u32 %s186, 4
          %s189 = int_to_ptr.hbm [resolvable:$true] %s188
          %s190 = sshll.u32 %s182, 4
          %s191 = int_to_ptr.vmem [resolvable:$true] %s190
          %193 = dma.hbm_to_vmem [thread:$0]  %s189, 128, %s191, %s179
        $region28: #{tpu_custom_call.1} parent=23 // pred_fallthru
          _
      $region24: #{tpu_custom_call.1} parent=5 // pred_fallthru
        _
      %p194 = scmp.le.s32.totalorder 1, %s16
      %p195 = scmp.lt.s32.totalorder %s16, 3
      %p196 = pnand %p194, %p195
      %p197 = pneg %p196
      // Predicated region
      $region29: #{tpu_custom_call.1} parent=5 // pred_check
        _
      $region30: #{tpu_custom_call.1} parent=5 // pred_check_branch
        %199 = sbr.rel (%p196) target = $region32
      $region31: #{tpu_custom_call.1} parent=5 // pred_region
        %s200 = ssub.s32 %s16, 1
        %s201 = sand.u32 %s41, 1
        %s202 = scalar_lea.sflag [#allocation4], %s201
        %s203 = sand.u32 %s41, 1
        %s204 = smul.addr %s203, 8
        %s205 = scalar_lea.vmem [#allocation3], %s204
        // Predicated region
        $region33: #{tpu_custom_call.1} parent=31 // pred_check
          %p206 = pneg %p54
        $region34: #{tpu_custom_call.1} parent=31 // pred_check_branch
          %208 = sbr.rel (%p206) target = $region36
        $region35: #{tpu_custom_call.1} parent=31 // pred_region
          %210 = dma.done %s202, 128
        $region36: #{tpu_custom_call.1} parent=31 // pred_fallthru
          _
        // Predicated region
        $region37: #{tpu_custom_call.1} parent=31 // pred_check
          %p211 = pneg %p80
        $region38: #{tpu_custom_call.1} parent=31 // pred_check_branch
          %213 = sbr.rel (%p211) target = $region40
        $region39: #{tpu_custom_call.1} parent=31 // pred_region
          %215 = dma.done [#allocation7], 2048
        $region40: #{tpu_custom_call.1} parent=31 // pred_fallthru
          _
        %s216 = sand.u32 %s41, 1
        %s217 = scalar_lea.sflag [#allocation4], %s216
        %s218 = sand.u32 %s41, 1
        %s219 = smul.addr %s218, 8
        %s220 = scalar_lea.vmem [#allocation3], %s219
        %p221 = pneg %p54
        %p222 = pneg %p51
        %p223 = pneg %p80
        %p224 = pneg %p77
        %p225 = scmp.lt.s32.totalorder %s26, 0
        %s226 = scalar_select %p225, %s26, 0
        %s227 = scalar_lea.vmem %s2, %s226
        %p228 = pneg %p106
        %p229 = pneg %p103
        %p230 = pneg %p134
        %p231 = pneg %p131
        %s232 = sand.u32 %s121, 1
        %s233 = scalar_lea.sflag [#allocation5], %s232
        %s234 = sand.u32 %s121, 1
        %s235 = smul.addr %s234, 8
        %s236 = scalar_lea.vmem [#allocation8], %s235
        %p237 = scmp.lt.s32.totalorder %s26, 0
        %s238 = scalar_select %p237, %s26, 0
        %s239 = scalar_lea.vmem %s2, %s238
        %p240 = scmp.eq.s32.totalorder %s26, 0
        // Predicated region
        $region41: #{tpu_custom_call.1} parent=31 // pred_check
          %p241 = pneg %p240
        $region42: #{tpu_custom_call.1} parent=31 // pred_check_branch
          %243 = sbr.rel (%p241) target = $region44
        $region43: #{tpu_custom_call.1} parent=31 // pred_region
          %v244 = vld [vmem:[%s205] sm:$0xff]
          %245 = vadd.xlane.f32.xlu0 %v244
          %v246 = vpop.xlane.xlu0 %245
          %v247 = vmul.f32 %v246, 0.03125
          %v248 = vsub.f32 %v244, %v247
          %v249 = vlaneseq
          %v250 = vand.u32 %v249, 127
          %vm251 = vcmp.lt.s32.totalorder %v250, 32
          %v252 = vsel %vm251, %v248, 0.0
          %v253 = vmul.f32 %v252, %v252
          %254 = vadd.xlane.f32.xlu0 %v253
          %v255 = vpop.xlane.xlu0 %254
          %v256 = vmul.f32 %v255, 0.03125
          %v257 = vadd.f32 %v256, 1e-05
          %v258 = vrsqrt.pop %v257
          %v259 = vmul.f32 %v258, %v257
          %v260 = vmul.f32 %v259, %v258
          %v261 = vmul.f32 0.5, %v260
          %v262 = vsub.f32 1.5, %v261
          %v263 = vmul.f32 %v258, %v262
          %vm264 = vweird.f32 %v257
          %vm265 = vweird.f32 %v258
          %vm266 = vmor %vm264, %vm265
          %v267 = vsel %vm266, %v258, %v263
          %v268 = vmul.f32 %v252, %v267
          %269 = vst [vmem:[#allocation2] sm:$0xff] %v268
        $region44: #{tpu_custom_call.1} parent=31 // pred_fallthru
          _
        %v270 = vld [vmem:[#allocation2] sm:$0xff]
        %v271 = vld [vmem:[#allocation6] sm:$0xff]
        %v272 = vld [vmem:[#allocation6 + $0x8] sm:$0xff]
        %v273 = vld [vmem:[#allocation6 + $0x10] sm:$0xff]
        %v274 = vld [vmem:[#allocation6 + $0x18] sm:$0xff]
        %v275 = vld [vmem:[#allocation6 + $0x20] sm:$0xff]
        %v276 = vld [vmem:[#allocation6 + $0x28] sm:$0xff]
        %v277 = vld [vmem:[#allocation6 + $0x30] sm:$0xff]
        %v278 = vld [vmem:[#allocation6 + $0x38] sm:$0xff]
        %v279 = vld [vmem:[#allocation6 + $0x40] sm:$0xff]
        %v280 = vld [vmem:[#allocation6 + $0x48] sm:$0xff]
        %v281 = vld [vmem:[#allocation6 + $0x50] sm:$0xff]
        %v282 = vld [vmem:[#allocation6 + $0x58] sm:$0xff]
        %v283 = vld [vmem:[#allocation6 + $0x60] sm:$0xff]
        %v284 = vld [vmem:[#allocation6 + $0x68] sm:$0xff]
        %v285 = vld [vmem:[#allocation6 + $0x70] sm:$0xff]
        %v286 = vld [vmem:[#allocation6 + $0x78] sm:$0xff]
        %v287 = vld [vmem:[%s239] sm:$0x1]
        %v289 = vperm.slane %v287, 0
        %291 = vmatpush.msra.mxu0 %v286
        %292 = vmatpush.msra.mxu0 %v285
        %293 = vmatpush.msra.mxu0 %v284
        %294 = vmatpush.msra.mxu0 %v283
        %295 = vmatpush.msra.mxu0 %v282
        %296 = vmatpush.msra.mxu0 %v281
        %297 = vmatpush.msra.mxu0 %v280
        %298 = vmatpush.msra.mxu0 %v279
        %299 = vmatpush.msra.mxu0 %v278
        %300 = vmatpush.msra.mxu0 %v277
        %301 = vmatpush.msra.mxu0 %v276
        %302 = vmatpush.msra.mxu0 %v275
        %303 = vmatpush.msra.mxu0 %v274
        %304 = vmatpush.msra.mxu0 %v273
        %305 = vmatpush.msra.mxu0 %v272
        %306 = vmatpush.msra.mxu0 %v271
        %307 = vmatmul.f32.gmra.mxu0 %v270
        %v308 = vpop.f32.mrf.mxu0
        %v309 = vadd.f32 %v289, %v308
        %310 = vdwg.mxu0
        %311 = vst [vmem:[%s236] sm:$0xff] %v309
        %s312 = sand.u32 %s121, 1
        %s313 = scalar_lea.sflag [#allocation5], %s312
        %s314 = sand.u32 %s121, 1
        %s315 = smul.addr %s314, 8
        %s316 = scalar_lea.vmem [#allocation8], %s315
        // Predicated region
        $region45: #{tpu_custom_call.1} parent=31 // pred_check
          %p317 = pneg %p131
        $region46: #{tpu_custom_call.1} parent=31 // pred_check_branch
          %319 = sbr.rel (%p317) target = $region48
        $region47: #{tpu_custom_call.1} parent=31 // pred_region
          %321 = vsyncadd %s313, 0
          %s322 = sadd.s32 %s26, %s25
          %s323 = smul.addr %s322, 8
          %s324 = scalar_lea.hbm %s3, %s323
          %s326 = sshll.u32 %s316, 4
          %s327 = int_to_ptr.vmem [resolvable:$true] %s326
          %s328 = sshll.u32 %s324, 4
          %s329 = int_to_ptr.hbm [resolvable:$true] %s328
          %331 = dma.vmem_to_hbm [thread:$0]  %s327, 128, %s329, %s313
        $region48: #{tpu_custom_call.1} parent=31 // pred_fallthru
          _
      $region32: #{tpu_custom_call.1} parent=5 // pred_fallthru
        _
      %p332 = scmp.le.s32.totalorder 2, %s16
      // Predicated region
      $region49: #{tpu_custom_call.1} parent=5 // pred_check
        %p333 = pneg %p332
      $region50: #{tpu_custom_call.1} parent=5 // pred_check_branch
        %335 = sbr.rel (%p333) target = $region52
      $region51: #{tpu_custom_call.1} parent=5 // pred_region
        %s336 = ssub.s32 %s16, 2
        // Predicated region
        $region53: #{tpu_custom_call.1} parent=51 // pred_check
          %p337 = pneg %p137
        $region54: #{tpu_custom_call.1} parent=51 // pred_check_branch
          %339 = sbr.rel (%p337) target = $region56
        $region55: #{tpu_custom_call.1} parent=51 // pred_region
          %s340 = sand.u32 %s122, 1
          %s341 = scalar_lea.sflag [#allocation5], %s340
          %s342 = sand.u32 %s122, 1
          %s343 = smul.addr %s342, 8
          %s344 = scalar_lea.vmem [#allocation8], %s343
          %346 = dma.done %s341, 128
        $region56: #{tpu_custom_call.1} parent=51 // pred_fallthru
          _
      $region52: #{tpu_custom_call.1} parent=5 // pred_fallthru
        _
    $region6: #{tpu_custom_call.1} parent=1 // loop_footer
      %s20 = sadd.s32 1, %s16
    $region7: #{tpu_custom_call.1} parent=1 // loop_footer_branch
      %15 = sbr.rel target = $region3
    $region8: #{tpu_custom_call.1} parent=1 // loop_exit
      _
    %347 = vsyncpa [#allocation4], 1
    %s348 = scalar_lea.sflag [#allocation4], 1
    %349 = vsyncpa %s348, 1
    %350 = vsyncpa [#allocation7], 1
    %351 = vsyncpa [#allocation5], 1
    %s352 = scalar_lea.sflag [#allocation5], 1
    %353 = vsyncpa %s352, 1

// kernel: tpu_custom_call.1
$region0: #{tpu_custom_call.1}
  #allocation0 [shape = 'u32[]', space=smem, size = 0x4, offset = 0x4, fixed_abs, tag = 'smem constant byte address 0x4 - core index']
  #allocation1 [shape = 'u32[72,128]{1,0:T(1,128)}', space=vmem, size = 0x9000, scoped, tag = 'internal scratch']
  #allocation2 [shape = 'f32[8,128]{1,0:T(8,128)}', space=vmem, size = 0x1000, scoped, tag = 'scratch operand']
  %s0 = inlined_call_operand.hbm [shape: f32[16,128], index: 0, kind: input, shape index: {}]
  %s1 = inlined_call_operand.hbm [shape: f32[128,128], index: 1, kind: input, shape index: {}]
  %s2 = inlined_call_operand.vmem [shape: f32[1,128], index: 2, kind: input, shape index: {}]
  %s3 = inlined_call_operand.hbm [shape: f32[16,128], index: 3, kind: output, shape index: {}]
  %s4 = sld [smem:[#allocation0]]
  $region57: #{tpu_custom_call.1} parent=0
    _
  %s6 = ssub.s32 1, %s4
  %s7 = scalar_select 0, %s6, %s4
  $region1: #{tpu_custom_call.1} parent=0
    #allocation3 [shape = 'u8[8192]{0}', space=vmem, size = 0x2000, scoped, tag = 'input window, operand 0']
    #allocation4 [shape = 's32[2]{0}', space=sflag, size = 0x8, scoped, tag = 'scoped memory for tpu_custom_call.1']
    #allocation5 [shape = 's32[2]{0}', space=sflag, size = 0x8, scoped, tag = 'scoped memory for tpu_custom_call.1']
    #allocation6 [shape = 'u8[65536]{0}', space=vmem, size = 0x10000, scoped, tag = 'input window, operand 1, single buffered']
    #allocation7 [shape = 's32[1]{0}', space=sflag, size = 0x4, scoped, tag = 'scoped memory for tpu_custom_call.1']
    #allocation8 [shape = 'u8[8192]{0}', space=vmem, size = 0x2000, scoped, tag = 'output window, operand 0']
    %8 = vsyncpa [#allocation4], 0
    %s9 = scalar_lea.sflag [#allocation4], 1
    %10 = vsyncpa %s9, 0
    %11 = vsyncpa [#allocation7], 0
    %12 = vsyncpa [#allocation5], 0
    %s13 = scalar_lea.sflag [#allocation5], 1
    %14 = vsyncpa %s13, 0
    loop: start=0, step=1, limit=4
    $region2: #{tpu_custom_call.1} parent=1 // loop_pre_header
      _
    $region3: #{tpu_custom_call.1} parent=1 // loop_header
      %s16 = sphi 0, %s20
      %p17 = scmp.ge.s32.totalorder %s16, 4
      %s23 = sphi 0, %s35
      %s24 = sphi 0, %s31
      %s25 = sphi 0, %s23
      %s26 = sphi 0, %s24
      %s27 = sphi 0, %s25
      %s28 = sphi 0, %s26
      %s38 = sphi 0, %s40
      %s41 = sphi 0, %s38
      %s42 = sphi 0, %s41
      %s58 = sphi 0, %s42
      %s64 = sphi 0, %s66
      %s67 = sphi 0, %s64
      %s68 = sphi 0, %s67
      %s84 = sphi 0, %s68
      %s90 = sphi 0, %s92
      %s93 = sphi 0, %s90
      %s94 = sphi 0, %s93
      %s110 = sphi 0, %s94
      %s118 = sphi 0, %s120
      %s121 = sphi 0, %s118
      %s122 = sphi 0, %s121
      %s138 = sphi 0, %s122
    $region4: #{tpu_custom_call.1} parent=1 // loop_header_branch
      %19 = sbr.rel (%p17) target = $region8
    $region5: #{tpu_custom_call.1} parent=1 // loop_body
      %s21 = ssub.s32 %s16, 1
      %s22 = ssub.s32 %s16, 2
      %s29 = sadd.s32 1, %s24
      %p30 = scmp.ge.s32.totalorder %s29, 1
      %s31 = scalar_select %p30, 0, %s29
      %s32 = sadd.s32 1, %s23
      %s33 = scalar_select %p30, %s32, %s23
      %p34 = scmp.ge.s32.totalorder %s33, 2
      %s35 = scalar_select %p34, 0, %s33
      %s36 = ssub.s32 %s23, %s35
      %p37 = scmp.eq.s32.totalorder %s36, 0
      %s39 = sadd.s32 %s38, 1
      %s40 = scalar_select %p37, %s38, %s39
      %p43 = pneg %p37
      %p44 = scmp.eq.s32.totalorder %s16, 1
      %p45 = por %p43, %p44
      %p46 = scmp.ne.s32.totalorder %s38, %s41
      %p47 = scmp.eq.s32.totalorder %s16, 0
      %p48 = por %p46, %p47
      %p49 = scmp.ne.s32.totalorder %s38, %s41
      %p50 = scmp.eq.s32.totalorder %s21, 1
      %p51 = por %p49, %p50
      %p52 = scmp.ne.s32.totalorder %s41, %s42
      %p53 = scmp.eq.s32.totalorder %s21, 0
      %p54 = por %p52, %p53
      %p55 = scmp.ne.s32.totalorder %s41, %s42
      %p56 = scmp.eq.s32.totalorder %s22, 1
      %p57 = por %p55, %p56
      %p59 = scmp.ne.s32.totalorder %s42, %s58
      %p60 = scmp.eq.s32.totalorder %s22, 0
      %p61 = por %p59, %p60
      %s62 = ssub.s32 %s24, %s31
      %p63 = scmp.eq.s32.totalorder %s62, 0
      %s65 = sadd.s32 %s64, 1
      %s66 = scalar_select %p63, %s64, %s65
      %p69 = pneg %p63
      %p70 = scmp.eq.s32.totalorder %s16, 1
      %p71 = por %p69, %p70
      %p72 = scmp.ne.s32.totalorder %s64, %s67
      %p73 = scmp.eq.s32.totalorder %s16, 0
      %p74 = por %p72, %p73
      %p75 = scmp.ne.s32.totalorder %s64, %s67
      %p76 = scmp.eq.s32.totalorder %s21, 1
      %p77 = por %p75, %p76
      %p78 = scmp.ne.s32.totalorder %s67, %s68
      %p79 = scmp.eq.s32.totalorder %s21, 0
      %p80 = por %p78, %p79
      %p81 = scmp.ne.s32.totalorder %s67, %s68
      %p82 = scmp.eq.s32.totalorder %s22, 1
      %p83 = por %p81, %p82
      %p85 = scmp.ne.s32.totalorder %s68, %s84
      %p86 = scmp.eq.s32.totalorder %s22, 0
      %p87 = por %p85, %p86
      %s88 = ssub.s32 %s24, %s31
      %p89 = scmp.eq.s32.totalorder %s88, 0
      %s91 = sadd.s32 %s90, 1
      %s92 = scalar_select %p89, %s90, %s91
      %p95 = pneg %p89
      %p96 = scmp.eq.s32.totalorder %s16, 1
      %p97 = por %p95, %p96
      %p98 = scmp.ne.s32.totalorder %s90, %s93
      %p99 = scmp.eq.s32.totalorder %s16, 0
      %p100 = por %p98, %p99
      %p101 = scmp.ne.s32.totalorder %s90, %s93
      %p102 = scmp.eq.s32.totalorder %s21, 1
      %p103 = por %p101, %p102
      %p104 = scmp.ne.s32.totalorder %s93, %s94
      %p105 = scmp.eq.s32.totalorder %s21, 0
      %p106 = por %p104, %p105
      %p107 = scmp.ne.s32.totalorder %s93, %s94
      %p108 = scmp.eq.s32.totalorder %s22, 1
      %p109 = por %p107, %p108
      %p111 = scmp.ne.s32.totalorder %s94, %s110
      %p112 = scmp.eq.s32.totalorder %s22, 0
      %p113 = por %p111, %p112
      %s114 = ssub.s32 %s23, %s35
      %s115 = ssub.s32 %s24, %s31
      %s116 = sor.u32 %s114, %s115
      %p117 = scmp.eq.s32.totalorder %s116, 0
      %s119 = sadd.s32 %s118, 1
      %s120 = scalar_select %p117, %s118, %s119
      %p123 = pneg %p117
      %p124 = scmp.eq.s32.totalorder %s16, 1
      %p125 = por %p123, %p124
      %p126 = scmp.ne.s32.totalorder %s118, %s121
      %p127 = scmp.eq.s32.totalorder %s16, 0
      %p128 = por %p126, %p127
      %p129 = scmp.ne.s32.totalorder %s118, %s121
      %p130 = scmp.eq.s32.totalorder %s21, 1
      %p131 = por %p129, %p130
      %p132 = scmp.ne.s32.totalorder %s121, %s122
      %p133 = scmp.eq.s32.totalorder %s21, 0
      %p134 = por %p132, %p133
      %p135 = scmp.ne.s32.totalorder %s121, %s122
      %p136 = scmp.eq.s32.totalorder %s22, 1
      %p137 = por %p135, %p136
      %p139 = scmp.ne.s32.totalorder %s122, %s138
      %p140 = scmp.eq.s32.totalorder %s22, 0
      %p141 = por %p139, %p140
      %p142 = scmp.le.s32.totalorder 1, %s16
      %p143 = scmp.lt.s32.totalorder %s16, 3
      %p144 = pnand %p142, %p143
      %p145 = pneg %p144
      // Predicated region
      $region9: #{tpu_custom_call.1} parent=5 // pred_check
        _
      $region10: #{tpu_custom_call.1} parent=5 // pred_check_branch
        %147 = sbr.rel (%p144) target = $region12
      $region11: #{tpu_custom_call.1} parent=5 // pred_region
        %s148 = ssub.s32 %s16, 1
        // Predicated region
        $region13: #{tpu_custom_call.1} parent=11 // pred_check
          %p149 = pneg %p80
        $region14: #{tpu_custom_call.1} parent=11 // pred_check_branch
          %151 = sbr.rel (%p149) target = $region16
        $region15: #{tpu_custom_call.1} parent=11 // pred_region
          %153 = vsyncadd [#allocation7], 0
          %s154 = smul.addr %s26, 8
          %s155 = scalar_lea.hbm %s1, %s154
          %s156 = sshll.u32 %s155, 4
          %s157 = int_to_ptr.hbm [resolvable:$true] %s156
          %s158 = sshll.u32 [#allocation6], 4
          %s159 = int_to_ptr.vmem [resolvable:$true] %s158
          %164 = dma.hbm_to_vmem [thread:$0]  %s157, 2048, %s159, [#allocation7], 128, 128, 8
        $region16: #{tpu_custom_call.1} parent=11 // pred_fallthru
          _
        // Predicated region
        $region17: #{tpu_custom_call.1} parent=11 // pred_check
          %p165 = pneg %p106
        $region18: #{tpu_custom_call.1} parent=11 // pred_check_branch
          %167 = sbr.rel (%p165) target = $region20
        $region19: #{tpu_custom_call.1} parent=11 // pred_region
          %p168 = scmp.lt.s32.totalorder %s26, 0
          %s169 = scalar_select %p168, %s26, 0
          %s170 = scalar_lea.vmem %s2, %s169
        $region20: #{tpu_custom_call.1} parent=11 // pred_fallthru
          _
      $region12: #{tpu_custom_call.1} parent=5 // pred_fallthru
        _
      %p171 = scmp.lt.s32.totalorder %s16, 2
      // Predicated region
      $region21: #{tpu_custom_call.1} parent=5 // pred_check
        %p172 = pneg %p171
      $region22: #{tpu_custom_call.1} parent=5 // pred_check_branch
        %174 = sbr.rel (%p172) target = $region24
      $region23: #{tpu_custom_call.1} parent=5 // pred_region
        // Predicated region
        $region25: #{tpu_custom_call.1} parent=23 // pred_check
          %p175 = pneg %p48
        $region26: #{tpu_custom_call.1} parent=23 // pred_check_branch
          %177 = sbr.rel (%p175) target = $region28
        $region27: #{tpu_custom_call.1} parent=23 // pred_region
          %s178 = sand.u32 %s38, 1
          %s179 = scalar_lea.sflag [#allocation4], %s178
          %s180 = sand.u32 %s38, 1
          %s181 = smul.addr %s180, 8
          %s182 = scalar_lea.vmem [#allocation3], %s181
          %184 = vsyncadd %s179, 0
          %s185 = smul.addr %s23, 8
          %s186 = scalar_lea.hbm %s0, %s185
          %s188 = sshll.u32 %s186, 4
          %s189 = int_to_ptr.hbm [resolvable:$true] %s188
          %s190 = sshll.u32 %s182, 4
          %s191 = int_to_ptr.vmem [resolvable:$true] %s190
          %193 = dma.hbm_to_vmem [thread:$0]  %s189, 128, %s191, %s179
        $region28: #{tpu_custom_call.1} parent=23 // pred_fallthru
          _
      $region24: #{tpu_custom_call.1} parent=5 // pred_fallthru
        _
      %p194 = scmp.le.s32.totalorder 1, %s16
      %p195 = scmp.lt.s32.totalorder %s16, 3
      %p196 = pnand %p194, %p195
      %p197 = pneg %p196
      // Predicated region
      $region29: #{tpu_custom_call.1} parent=5 // pred_check
        _
      $region30: #{tpu_custom_call.1} parent=5 // pred_check_branch
        %199 = sbr.rel (%p196) target = $region32
      $region31: #{tpu_custom_call.1} parent=5 // pred_region
        %s200 = ssub.s32 %s16, 1
        %s201 = sand.u32 %s41, 1
        %s202 = scalar_lea.sflag [#allocation4], %s201
        %s203 = sand.u32 %s41, 1
        %s204 = smul.addr %s203, 8
        %s205 = scalar_lea.vmem [#allocation3], %s204
        // Predicated region
        $region33: #{tpu_custom_call.1} parent=31 // pred_check
          %p206 = pneg %p54
        $region34: #{tpu_custom_call.1} parent=31 // pred_check_branch
          %208 = sbr.rel (%p206) target = $region36
        $region35: #{tpu_custom_call.1} parent=31 // pred_region
          %210 = dma.done %s202, 128
        $region36: #{tpu_custom_call.1} parent=31 // pred_fallthru
          _
        // Predicated region
        $region37: #{tpu_custom_call.1} parent=31 // pred_check
          %p211 = pneg %p80
        $region38: #{tpu_custom_call.1} parent=31 // pred_check_branch
          %213 = sbr.rel (%p211) target = $region40
        $region39: #{tpu_custom_call.1} parent=31 // pred_region
          %215 = dma.done [#allocation7], 2048
        $region40: #{tpu_custom_call.1} parent=31 // pred_fallthru
          _
        %s216 = sand.u32 %s41, 1
        %s217 = scalar_lea.sflag [#allocation4], %s216
        %s218 = sand.u32 %s41, 1
        %s219 = smul.addr %s218, 8
        %s220 = scalar_lea.vmem [#allocation3], %s219
        %p221 = pneg %p54
        %p222 = pneg %p51
        %p223 = pneg %p80
        %p224 = pneg %p77
        %p225 = scmp.lt.s32.totalorder %s26, 0
        %s226 = scalar_select %p225, %s26, 0
        %s227 = scalar_lea.vmem %s2, %s226
        %p228 = pneg %p106
        %p229 = pneg %p103
        %p230 = pneg %p134
        %p231 = pneg %p131
        %s232 = sand.u32 %s121, 1
        %s233 = scalar_lea.sflag [#allocation5], %s232
        %s234 = sand.u32 %s121, 1
        %s235 = smul.addr %s234, 8
        %s236 = scalar_lea.vmem [#allocation8], %s235
        %p237 = scmp.lt.s32.totalorder %s26, 0
        %s238 = scalar_select %p237, %s26, 0
        %s239 = scalar_lea.vmem %s2, %s238
        %p240 = scmp.eq.s32.totalorder %s26, 0
        // Predicated region
        $region41: #{tpu_custom_call.1} parent=31 // pred_check
          %p241 = pneg %p240
        $region42: #{tpu_custom_call.1} parent=31 // pred_check_branch
          %243 = sbr.rel (%p241) target = $region44
        $region43: #{tpu_custom_call.1} parent=31 // pred_region
          %v244 = vld [vmem:[%s205] sm:$0xff]
          %245 = vadd.xlane.f32.xlu0 %v244
          %v246 = vpop.xlane.xlu0 %245
          %v247 = vmul.f32 %v246, 0.03125
          %v248 = vsub.f32 %v244, %v247
          %v249 = vlaneseq
          %v250 = vand.u32 %v249, 127
          %vm251 = vcmp.lt.s32.totalorder %v250, 32
          %v252 = vsel %vm251, %v248, 0.0
          %v253 = vmul.f32 %v252, %v252
          %254 = vadd.xlane.f32.xlu0 %v253
          %v255 = vpop.xlane.xlu0 %254
          %v256 = vmul.f32 %v255, 0.03125
          %v257 = vadd.f32 %v256, 1e-05
          %v258 = vrsqrt.pop %v257
          %v259 = vmul.f32 %v258, %v257
          %v260 = vmul.f32 %v259, %v258
          %v261 = vmul.f32 0.5, %v260
          %v262 = vsub.f32 1.5, %v261
          %v263 = vmul.f32 %v258, %v262
          %vm264 = vweird.f32 %v257
          %vm265 = vweird.f32 %v258
          %vm266 = vmor %vm264, %vm265
          %v267 = vsel %vm266, %v258, %v263
          %v268 = vmul.f32 %v252, %v267
          %269 = vst [vmem:[#allocation2] sm:$0xff] %v268
        $region44: #{tpu_custom_call.1} parent=31 // pred_fallthru
          _
        %v270 = vld [vmem:[#allocation2] sm:$0xff]
        %v271 = vld [vmem:[#allocation6] sm:$0xff]
        %v272 = vld [vmem:[#allocation6 + $0x8] sm:$0xff]
        %v273 = vld [vmem:[#allocation6 + $0x10] sm:$0xff]
        %v274 = vld [vmem:[#allocation6 + $0x18] sm:$0xff]
        %v275 = vld [vmem:[#allocation6 + $0x20] sm:$0xff]
        %v276 = vld [vmem:[#allocation6 + $0x28] sm:$0xff]
        %v277 = vld [vmem:[#allocation6 + $0x30] sm:$0xff]
        %v278 = vld [vmem:[#allocation6 + $0x38] sm:$0xff]
        %v279 = vld [vmem:[#allocation6 + $0x40] sm:$0xff]
        %v280 = vld [vmem:[#allocation6 + $0x48] sm:$0xff]
        %v281 = vld [vmem:[#allocation6 + $0x50] sm:$0xff]
        %v282 = vld [vmem:[#allocation6 + $0x58] sm:$0xff]
        %v283 = vld [vmem:[#allocation6 + $0x60] sm:$0xff]
        %v284 = vld [vmem:[#allocation6 + $0x68] sm:$0xff]
        %v285 = vld [vmem:[#allocation6 + $0x70] sm:$0xff]
        %v286 = vld [vmem:[#allocation6 + $0x78] sm:$0xff]
        %v287 = vld [vmem:[%s239] sm:$0x1]
        %v289 = vperm.slane %v287, 0
        %291 = vmatpush.msra.mxu0 %v286
        %292 = vmatpush.msra.mxu0 %v285
        %293 = vmatpush.msra.mxu0 %v284
        %294 = vmatpush.msra.mxu0 %v283
        %295 = vmatpush.msra.mxu0 %v282
        %296 = vmatpush.msra.mxu0 %v281
        %297 = vmatpush.msra.mxu0 %v280
        %298 = vmatpush.msra.mxu0 %v279
        %299 = vmatpush.msra.mxu0 %v278
        %300 = vmatpush.msra.mxu0 %v277
        %301 = vmatpush.msra.mxu0 %v276
        %302 = vmatpush.msra.mxu0 %v275
        %303 = vmatpush.msra.mxu0 %v274
        %304 = vmatpush.msra.mxu0 %v273
        %305 = vmatpush.msra.mxu0 %v272
        %306 = vmatpush.msra.mxu0 %v271
        %307 = vmatmul.f32.gmra.mxu0 %v270
        %v308 = vpop.f32.mrf.mxu0
        %v309 = vadd.f32 %v289, %v308
        %310 = vdwg.mxu0
        %311 = vst [vmem:[%s236] sm:$0xff] %v309
        %s312 = sand.u32 %s121, 1
        %s313 = scalar_lea.sflag [#allocation5], %s312
        %s314 = sand.u32 %s121, 1
        %s315 = smul.addr %s314, 8
        %s316 = scalar_lea.vmem [#allocation8], %s315
        // Predicated region
        $region45: #{tpu_custom_call.1} parent=31 // pred_check
          %p317 = pneg %p131
        $region46: #{tpu_custom_call.1} parent=31 // pred_check_branch
          %319 = sbr.rel (%p317) target = $region48
        $region47: #{tpu_custom_call.1} parent=31 // pred_region
          %321 = vsyncadd %s313, 0
          %s322 = sadd.s32 %s26, %s25
          %s323 = smul.addr %s322, 8
          %s324 = scalar_lea.hbm %s3, %s323
          %s326 = sshll.u32 %s316, 4
          %s327 = int_to_ptr.vmem [resolvable:$true] %s326
          %s328 = sshll.u32 %s324, 4
          %s329 = int_to_ptr.hbm [resolvable:$true] %s328
          %331 = dma.vmem_to_hbm [thread:$0]  %s327, 128, %s329, %s313
        $region48: #{tpu_custom_call.1} parent=31 // pred_fallthru
          _
      $region32: #{tpu_custom_call.1} parent=5 // pred_fallthru
        _
      %p332 = scmp.le.s32.totalorder 2, %s16
      // Predicated region
      $region49: #{tpu_custom_call.1} parent=5 // pred_check
        %p333 = pneg %p332
      $region50: #{tpu_custom_call.1} parent=5 // pred_check_branch
        %335 = sbr.rel (%p333) target = $region52
      $region51: #{tpu_custom_call.1} parent=5 // pred_region
        %s336 = ssub.s32 %s16, 2
        // Predicated region
        $region53: #{tpu_custom_call.1} parent=51 // pred_check
          %p337 = pneg %p137
        $region54: #{tpu_custom_call.1} parent=51 // pred_check_branch
          %339 = sbr.rel (%p337) target = $region56
        $region55: #{tpu_custom_call.1} parent=51 // pred_region
          %s340 = sand.u32 %s122, 1
          %s341 = scalar_lea.sflag [#allocation5], %s340
          %s342 = sand.u32 %s122, 1
          %s343 = smul.addr %s342, 8
          %s344 = scalar_lea.vmem [#allocation8], %s343
          %346 = dma.done %s341, 128
        $region56: #{tpu_custom_call.1} parent=51 // pred_fallthru
          _
      $region52: #{tpu_custom_call.1} parent=5 // pred_fallthru
        _
    $region6: #{tpu_custom_call.1} parent=1 // loop_footer
      %s20 = sadd.s32 1, %s16
    $region7: #{tpu_custom_call.1} parent=1 // loop_footer_branch
      %15 = sbr.rel target = $region3
    $region8: #{tpu_custom_call.1} parent=1 // loop_exit
      _
    %347 = vsyncpa [#allocation4], 1
    %s348 = scalar_lea.sflag [#allocation4], 1
    %349 = vsyncpa %s348, 1
    %350 = vsyncpa [#allocation7], 1
    %351 = vsyncpa [#allocation5], 1
    %s352 = scalar_lea.sflag [#allocation5], 1
    %353 = vsyncpa %s352, 1

</llo_original>
